<compile_context>
chip_gen: v7x
topology: tpu7x:2x2x1
jax: 0.10.0
libtpu: 0.0.40
codegen_flags: <defaults>
</compile_context>

<pallas_src>
import math

import jax
import jax.numpy as jnp
from jax.experimental import pallas as pl
from jax.experimental.pallas import tpu as pltpu


# Finite "-inf": padded / non-neighbor entries must stay finite pre-exp so padded rows never
# produce NaN before they are sliced off (do NOT replace with -jnp.inf).
_NEG_INF = -1e30


# ---------------------------------------------------------------------------
# Hardware-aware sizing helpers
# ---------------------------------------------------------------------------

def _round_up(a, b):
    return ((a + b - 1) // b) * b


def _vmem_limit_bytes():
    """Generation-aware VMEM limit: ~3/4 of physical (96 MiB on v5e/v6e, 48 MiB on v7x)."""
    cap = 64 * 1024 * 1024
    try:
        info = pltpu.get_tpu_info()
        c = int(getattr(info, "vmem_capacity_bytes"))
        if c > 0:
            cap = c
    except Exception:
        pass
    return min((cap * 3) // 4, 100 * 1024 * 1024)


def _pick_row_tile(n_rows, approx_src, *, vmem_limit, row_tile=None):
    """Rows per grid step.

    Working set per row ~ Ns * (2x int8 adj DMA buffers + f32 e + p + bf16 p) ~= 14 B/cell.
    Auto path: biggest multiple of 32 under ~55% of the VMEM limit, capped at 1024, and capped
    so the grid has >=2 steps (both v7x TensorCores get work via the 'parallel' axis).
    """
    if row_tile is not None:
        tm = min(int(row_tile), max(n_rows, 32))
        return max(32, (tm // 32) * 32)
    budget = int(vmem_limit * 0.55)
    per_row = max(1, approx_src) * 14
    tm = budget // per_row
    tm = max(32, min(1024, (tm // 32) * 32))
    tm = min(tm, _round_up(n_rows, 32))
    if n_rows > 32:
        tm = min(tm, max(32, _round_up((n_rows + 1) // 2, 32)))
    return tm


def _pad_rows(arr, n_pad):
    n = arr.shape[0]
    if n_pad == n:
        return arr
    return jnp.pad(arr, ((0, n_pad - n),) + ((0, 0),) * (arr.ndim - 1))


# ---------------------------------------------------------------------------
# Pallas kernels
# ---------------------------------------------------------------------------

def _proj_kernel(x_ref, w_ref, ones_ref, sel_ref, hh_ref, alpha_ref):
    """Fused projection for all heads.

    hh_aug = x @ W_aug + ones_row   (W_aug has a zero column per head; ones_row puts a 1 there,
                                     so each head slab is [x @ W_h | 1] — the denominator column)
    alpha  = hh_aug @ sel_aug       (block-diagonal att selector with zero rows at the 1-columns,
                                     i.e. alpha[:, h] = (x @ W_h) . att_h exactly as in PyTorch)
    """
    hh = jnp.dot(x_ref[...], w_ref[...], preferred_element_type=jnp.float32) + ones_ref[...]
    alpha_ref[...] = jnp.dot(hh, sel_ref[...], preferred_element_type=jnp.float32)
    hh_ref[...] = hh.astype(jnp.bfloat16)          # bf16 MXU operand for the attention matmul


def _attn_kernel_factory(H, C, *, concat, apply_elu, fuse_q, v=1.0, neg_slope=0.2):
    """Dense MGATConv attention for one dst-row tile (optionally fused Student-t epilogue).

    refs (inputs): adj (TM, Ns) int8, m (TM, 1) f32 [= 1/deg + 1/deg^2, precomputed],
                   alpha_dst (TM, H) f32, alpha_src^T (H, Ns) f32, alpha_src_max (1, H) f32,
                   hh_aug (Ns, H*(C+1)) bf16, bias (1, out_dim) f32, [clusters^T (C, K) f32].
    refs (outputs): out (TM, out_dim), [q (TM, K) f32].
    """
    caug = C + 1
    expo = (v + 1.0) / 2.0

    def kernel(adj_ref, m_ref, a_dst_ref, a_srct_ref, a_max_ref, hh_ref, bias_ref, *rest):
        if fuse_q:
            ct_ref, out_ref, q_ref = rest
        else:
            (out_ref,) = rest

        mask = adj_ref[...] > 0                       # int8 -> bool, no f32 slab materialized
        m = m_ref[...]                                # (TM, 1) precomputed M_i
        a_dst = a_dst_ref[...]                        # (TM, H)
        a_srct = a_srct_ref[...]                      # (H, Ns)
        a_max = a_max_ref[...]                        # (1, H)

        head_outs = []
        for h in range(H):
            # e[i, j] = leaky_relu((alpha_src[j] + alpha_dst[i]) * M_i); softmax over src j.
            logit = (a_srct[h:h + 1, :] + a_dst[:, h:h + 1]) * m          # (TM, Ns)
            e = jnp.where(logit > 0, logit, neg_slope * logit)
            # Exact softmax shift via a per-row scalar UPPER BOUND (monotone leaky_relu, m > 0):
            # softmax is shift-invariant, so subtracting ub instead of the row max is exact math
            # and removes an XLU cross-lane max of (TM, Ns) per head.
            ub_lin = (a_max[0, h] + a_dst[:, h:h + 1]) * m                # (TM, 1)
            ub = jnp.where(ub_lin > 0, ub_lin, neg_slope * ub_lin)
            e = jnp.where(mask, e - ub, _NEG_INF)
            p = jnp.exp(e).astype(jnp.bfloat16)       # masked entries underflow to exact 0
            # One MXU matmul yields weighted sum AND softmax denominator (ones column of hh_aug).
            pv = jnp.dot(p, hh_ref[:, h * caug:(h + 1) * caug],
                         preferred_element_type=jnp.float32)              # (TM, C+1)
            denom = jnp.maximum(pv[:, C:caug], 1e-20)  # guard: all-masked (padded) rows stay finite
            head_outs.append(pv[:, :C] / denom)

        if concat:
            y = jnp.concatenate(head_outs, axis=1) + bias_ref[...]        # (TM, H*C)
        else:
            acc = head_outs[0]
            for t in head_outs[1:]:
                acc = acc + t
            y = acc * (1.0 / H) + bias_ref[...]                           # (TM, C)
        if apply_elu:
            y = jnp.where(y > 0, y, jnp.exp(jnp.minimum(y, 0.0)) - 1.0)
        out_ref[...] = y.astype(out_ref.dtype)                            # single lane-dense store

        if fuse_q:
            # Student-t soft assignment fused into the epilogue: dist = ||z||^2+||c||^2-2 z@c^T.
            ct = ct_ref[...]                                              # (C, K)
            zz = jnp.sum(y * y, axis=1, keepdims=True)                    # (TM, 1)
            cc = jnp.sum(ct * ct, axis=0, keepdims=True)                  # (1, K)
            cross = jnp.dot(y, ct, preferred_element_type=jnp.float32)    # (TM, K) on the MXU
            dist = jnp.maximum(zz + cc - 2.0 * cross, 0.0)
            q = 1.0 / (1.0 + dist * (1.0 / v))
            if abs(expo - 1.0) > 1e-12:
                q = q ** expo
            q_ref[...] = q / jnp.sum(q, axis=1, keepdims=True)            # exact row normalization

    return kernel


# ---------------------------------------------------------------------------
# Wrappers
# ---------------------------------------------------------------------------

def _augment_params(w, att, heads, out_ch):
    """Tiny glue: augmented weight (zero col per head), ones-row, block-diag att selector."""
    f_in = w.shape[0]
    caug = out_ch + 1
    w3 = w.reshape(f_in, heads, out_ch)
    w_aug = jnp.concatenate([w3, jnp.zeros((f_in, heads, 1), w.dtype)], axis=2)
    w_aug = w_aug.reshape(f_in, heads * caug)
    ones_row = jnp.zeros((heads, caug), jnp.float32).at[:, out_ch].set(1.0)
    ones_row = ones_row.reshape(1, heads * caug)
    a = att.reshape(heads, out_ch).astype(jnp.float32)
    eye = jnp.eye(heads, dtype=jnp.float32)
    sel = a[:, :, None] * eye[:, None, :]                                 # (H, C, H)
    sel = jnp.concatenate([sel, jnp.zeros((heads, 1, heads), jnp.float32)], axis=1)
    sel_aug = sel.reshape(heads * caug, heads)
    return w_aug, ones_row, sel_aug


def gat_project(x, w_aug, ones_row, sel_aug, *, tm, vmem_limit):
    n_pad, f_in = x.shape
    hc_aug = w_aug.shape[1]
    heads = sel_aug.shape[1]
    grid = (n_pad // tm,)
    hh, alpha = pl.pallas_call(
        _proj_kernel,
        grid=grid,
        in_specs=[
            pl.BlockSpec((tm, f_in), lambda i: (i, 0)),
            pl.BlockSpec((f_in, hc_aug), lambda i: (0, 0)),
            pl.BlockSpec((1, hc_aug), lambda i: (0, 0)),
            pl.BlockSpec((hc_aug, heads), lambda i: (0, 0)),
        ],
        out_specs=[
            pl.BlockSpec((tm, hc_aug), lambda i: (i, 0)),
            pl.BlockSpec((tm, heads), lambda i: (i, 0)),
        ],
        out_shape=[
            jax.ShapeDtypeStruct((n_pad, hc_aug), jnp.bfloat16),
            jax.ShapeDtypeStruct((n_pad, heads), jnp.float32),
        ],
        compiler_params=pltpu.CompilerParams(
            dimension_semantics=("parallel",), vmem_limit_bytes=vmem_limit),
        cost_estimate=pl.CostEstimate(
            flops=int(2 * n_pad * f_in * hc_aug + 2 * n_pad * hc_aug * heads),
            transcendentals=0,
            bytes_accessed=int(n_pad * f_in * x.dtype.itemsize + f_in * hc_aug * w_aug.dtype.itemsize
                               + n_pad * hc_aug * 2 + n_pad * heads * 4)),
    )(x, w_aug, ones_row, sel_aug)
    return hh, alpha


def gat_attention(adj, m, alpha, hh_aug, bias, *, heads, out_ch, concat, apply_elu,
                  out_dtype, tm, vmem_limit, n_valid, clusters=None, v=1.0):
    n_pad, ns = adj.shape
    caug = out_ch + 1
    hc_aug = heads * caug
    out_dim = heads * out_ch if concat else out_ch
    a_src_t = jnp.transpose(alpha)                               # (H, Ns) tiny glue transpose
    a_max = jnp.max(alpha[:n_valid], axis=0, keepdims=True)      # (1, H) bound over real nodes only
    fuse_q = clusters is not None

    in_specs = [
        pl.BlockSpec((tm, ns), lambda i: (i, 0)),        # adjacency row tile (int8)
        pl.BlockSpec((tm, 1), lambda i: (i, 0)),         # precomputed M_i
        pl.BlockSpec((tm, heads), lambda i: (i, 0)),     # alpha for dst rows
        pl.BlockSpec((heads, ns), lambda i: (0, 0)),     # alpha for all src (transposed)
        pl.BlockSpec((1, heads), lambda i: (0, 0)),      # per-head max alpha_src (softmax bound)
        pl.BlockSpec((ns, hc_aug), lambda i: (0, 0)),    # projected features + ones cols (bf16)
        pl.BlockSpec((1, out_dim), lambda i: (0, 0)),    # bias
    ]
    args = [adj, m, alpha, a_src_t, a_max, hh_aug, bias]
    flops = heads * (2 * n_pad * ns * caug + 10 * n_pad * ns)
    if fuse_q:
        k = clusters.shape[0]
        ct = jnp.transpose(clusters).astype(jnp.float32)          # (Z, K)
        in_specs.append(pl.BlockSpec((out_ch, k), lambda i: (0, 0)))
        args.append(ct)
        out_specs = [pl.BlockSpec((tm, out_dim), lambda i: (i, 0)),
                     pl.BlockSpec((tm, k), lambda i: (i, 0))]
        out_shape = [jax.ShapeDtypeStruct((n_pad, out_dim), out_dtype),
                     jax.ShapeDtypeStruct((n_pad, k), jnp.float32)]
        flops += 2 * n_pad * out_ch * k + 10 * n_pad * k
    else:
        out_specs = pl.BlockSpec((tm, out_dim), lambda i: (i, 0))
        out_shape = jax.ShapeDtypeStruct((n_pad, out_dim), out_dtype)

    result = pl.pallas_call(
        _attn_kernel_factory(heads, out_ch, concat=concat, apply_elu=apply_elu,
                             fuse_q=fuse_q, v=v),
        grid=(n_pad // tm,),
        in_specs=in_specs,
        out_specs=out_specs,
        out_shape=out_shape,
        compiler_params=pltpu.CompilerParams(
            dimension_semantics=("parallel",), vmem_limit_bytes=vmem_limit),
        cost_estimate=pl.CostEstimate(
            flops=int(flops),
            transcendentals=int(heads * n_pad * ns),
            bytes_accessed=int(n_pad * ns * 1 + ns * hc_aug * 2 + n_pad * (heads + 1) * 4
                               + n_pad * out_dim * jnp.dtype(out_dtype).itemsize)),
    )(*args)
    return result


def build_adj_padded(edge_index, n, n_pad):
    """Dense adjacency built directly in int8 and already padded (single scatter, no f32 temps).

    remove_self_loops + add_self_loops ≡ force diag to 1 in the dense {0,1} picture.
    NOTE: dense adjacency deduplicates multi-edges (a duplicated (src,dst) pair counts once).
    """
    src, dst = edge_index[0], edge_index[1]
    adj = jnp.zeros((n_pad, n_pad), jnp.int8)
    adj = adj.at[dst, src].set(1)                     # adj[i, j] = edge j -> i
    idx = jnp.arange(n)
    adj = adj.at[idx, idx].set(1)                     # self loops on real nodes only
    return adj


def daegc_encoder_forward(params, x, edge_index, *, n_head_1, n_hidden, n_head_2, n_z,
                          v=1.0, row_tile=None):
    n = x.shape[0]
    vmem_limit = _vmem_limit_bytes()
    tm = _pick_row_tile(n, n, vmem_limit=vmem_limit, row_tile=row_tile)
    n_pad = _round_up(n, tm)

    # Adjacency + M_i computed ONCE and shared by both GAT layers.
    adj = build_adj_padded(edge_index, n, n_pad)                          # int8 (Np, Np)
    deg = jnp.maximum(jnp.sum(adj, axis=1, keepdims=True, dtype=jnp.float32), 1.0)
    inv = 1.0 / deg                                                       # exact reciprocal
    m = inv + inv * inv                                                   # order_t = 2

    x_p = _pad_rows(x, n_pad)

    # F.dropout(..., training=False) -> identity (eval mode)
    # Layer 1: heads concat + ELU, bf16 activations out (halves inter-layer HBM traffic,
    # makes layer-2 projection bf16-native on the MXU).
    w1a, ones1, sel1 = _augment_params(params["w1"], params["att1"], n_head_1, n_hidden)
    hh1, al1 = gat_project(x_p, w1a, ones1, sel1, tm=tm, vmem_limit=vmem_limit)
    h = gat_attention(adj, m, al1, hh1, params["b1"], heads=n_head_1, out_ch=n_hidden,
                      concat=True, apply_elu=True, out_dtype=jnp.bfloat16,
                      tm=tm, vmem_limit=vmem_limit, n_valid=n)

    # Layer 2: mean over heads, no ELU, fused Student-t soft assignment epilogue.
    w2a, ones2, sel2 = _augment_params(params["w2"], params["att2"], n_head_2, n_z)
    hh2, al2 = gat_project(h, w2a.astype(jnp.bfloat16), ones2, sel2, tm=tm, vmem_limit=vmem_limit)
    z, q = gat_attention(adj, m, al2, hh2, params["b2"], heads=n_head_2, out_ch=n_z,
                         concat=False, apply_elu=False, out_dtype=jnp.float32,
                         tm=tm, vmem_limit=vmem_limit, n_valid=n,
                         clusters=params["cluster"], v=v)
    return z[:n], q[:n]


# ---------------------------------------------------------------------------
# Deterministic parameter init + example run
# ---------------------------------------------------------------------------

def _glorot_uniform(key, shape, fan_in, fan_out):
    lim = math.sqrt(6.0 / (fan_in + fan_out))
    return jax.random.uniform(key, shape, jnp.float32, -lim, lim)


if __name__ == "__main__":
    # Small shapes consistent with the module
    N, E = 80, 400
    n_input, n_hidden, n_head_1 = 16, 8, 2
    n_head_2, n_z, n_clusters = 2, 8, 4

    key = jax.random.PRNGKey(0)
    kx, ks, kd, kw1, ka1, kw2, ka2, kc = jax.random.split(key, 8)

    x = jax.random.normal(kx, (N, n_input), jnp.float32)
    src = jax.random.randint(ks, (E,), 0, N)
    dst = jax.random.randint(kd, (E,), 0, N)
    edge_index = jnp.stack([src, dst])                   # (2, E)

    params = {
        # conv1: Linear(n_input, H1*n_hidden, bias=False), att_l (1,H1,n_hidden), bias zeros
        "w1": _glorot_uniform(kw1, (n_input, n_head_1 * n_hidden), n_input, n_head_1 * n_hidden),
        "att1": _glorot_uniform(ka1, (1, n_head_1 * n_hidden), n_head_1, n_hidden),
        "b1": jnp.zeros((1, n_head_1 * n_hidden), jnp.float32),
        # conv2: Linear(H1*n_hidden, H2*n_z, bias=False), att (1,H2,n_z), bias (n_z,) (concat=False)
        "w2": _glorot_uniform(kw2, (n_head_1 * n_hidden, n_head_2 * n_z),
                              n_head_1 * n_hidden, n_head_2 * n_z),
        "att2": _glorot_uniform(ka2, (1, n_head_2 * n_z), n_head_2, n_z),
        "b2": jnp.zeros((1, n_z), jnp.float32),
        # cluster_layer: xavier_normal_((n_clusters, n_z))
        "cluster": jax.random.normal(kc, (n_clusters, n_z), jnp.float32)
                   * math.sqrt(2.0 / (n_clusters + n_z)),
    }

    common = dict(n_head_1=n_head_1, n_hidden=n_hidden, n_head_2=n_head_2, n_z=n_z, v=1.0)

    # Path 1: auto tile (>= 2 grid steps for v7x megacore). Path 2: forced 32-row tiles.
    z1, q1 = daegc_encoder_forward(params, x, edge_index, row_tile=None, **common)
    z2, q2 = daegc_encoder_forward(params, x, edge_index, row_tile=32, **common)
    z1, q1, z2, q2 = jax.block_until_ready((z1, q1, z2, q2))

    assert z1.shape == (N, n_z) and q1.shape == (N, n_clusters)
    assert bool(jnp.all(jnp.isfinite(z1))) and bool(jnp.all(jnp.isfinite(q1)))
    assert bool(jnp.allclose(jnp.sum(q1, axis=1), 1.0, atol=1e-5))
    # The two tiling paths differ only by zero-padding; allow bf16-level slack.
    assert bool(jnp.allclose(z1, z2, rtol=5e-2, atol=5e-2))
    assert bool(jnp.allclose(q1, q2, rtol=5e-2, atol=5e-2))

    print("KERNEL_OK")
</pallas_src>

<mosaic_0001>
module attributes {stable_mosaic.version = 11 : i64} {
  func.func @_proj_kernel(%arg0: i32, %arg1: memref<64x16xf32, #tpu.memory_space<vmem>>, %arg2: memref<16x18xf32, #tpu.memory_space<vmem>>, %arg3: memref<1x18xf32, #tpu.memory_space<vmem>>, %arg4: memref<18x2xf32, #tpu.memory_space<vmem>>, %arg5: memref<64x18xbf16, #tpu.memory_space<vmem>>, %arg6: memref<64x2xf32, #tpu.memory_space<vmem>>) attributes {dimension_semantics = [#tpu.dimension_semantics<parallel>], iteration_bounds = array<i64: 2>, scalar_prefetch = 0 : i64, scratch_operands = 0 : i64, tpu.core_type = #tpu.core_type<tc>, window_params = [{transform_indices = @transform_0, window_bounds = array<i64: 64, 16>}, {pipeline_mode = #tpu.pipeline_mode<synchronous>, transform_indices = @transform_1, window_bounds = array<i64: 16, 18>}, {pipeline_mode = #tpu.pipeline_mode<synchronous>, transform_indices = @transform_2, window_bounds = array<i64: 1, 18>}, {pipeline_mode = #tpu.pipeline_mode<synchronous>, transform_indices = @transform_3, window_bounds = array<i64: 18, 2>}, {transform_indices = @transform_4, window_bounds = array<i64: 64, 18>}, {transform_indices = @transform_5, window_bounds = array<i64: 64, 2>}]} {
    %c0 = arith.constant 0 : index
    %c0_0 = arith.constant 0 : index
    %0 = vector.load %arg1[%c0, %c0_0] : memref<64x16xf32, #tpu.memory_space<vmem>>, vector<64x16xf32>
    %c0_1 = arith.constant 0 : index
    %c0_2 = arith.constant 0 : index
    %1 = vector.load %arg2[%c0_1, %c0_2] : memref<16x18xf32, #tpu.memory_space<vmem>>, vector<16x18xf32>
    %cst = arith.constant dense<0.000000e+00> : vector<64x18xf32>
    %2 = tpu.matmul %0, %1, %cst {dimension_numbers = #tpu.dot_dimension_numbers<[1], [0], [0], [1], [0, 0, 1, 1], [], []>} : vector<64x16xf32>, vector<16x18xf32>, vector<64x18xf32> -> vector<64x18xf32>
    %c0_3 = arith.constant 0 : index
    %c0_4 = arith.constant 0 : index
    %3 = vector.load %arg3[%c0_3, %c0_4] : memref<1x18xf32, #tpu.memory_space<vmem>>, vector<1x18xf32>
    %4 = vector.broadcast %3 : vector<1x18xf32> to vector<64x18xf32>
    %5 = arith.addf %2, %4 : vector<64x18xf32>
    %c0_5 = arith.constant 0 : index
    %c0_6 = arith.constant 0 : index
    %6 = vector.load %arg4[%c0_5, %c0_6] : memref<18x2xf32, #tpu.memory_space<vmem>>, vector<18x2xf32>
    %cst_7 = arith.constant dense<0.000000e+00> : vector<64x2xf32>
    %7 = tpu.matmul %5, %6, %cst_7 {dimension_numbers = #tpu.dot_dimension_numbers<[1], [0], [0], [1], [0, 0, 1, 1], [], []>} : vector<64x18xf32>, vector<18x2xf32>, vector<64x2xf32> -> vector<64x2xf32>
    %c0_8 = arith.constant 0 : index
    %c0_9 = arith.constant 0 : index
    %8 = vector.load %arg6[%c0_8, %c0_9] : memref<64x2xf32, #tpu.memory_space<vmem>>, vector<64x2xf32>
    tpu.vector_store %arg6[%c0_8, %c0_9], %7 {strides = array<i32>} : memref<64x2xf32, #tpu.memory_space<vmem>>, vector<64x2xf32>,
    %9 = arith.truncf %5 : vector<64x18xf32> to vector<64x18xbf16>
    %c0_10 = arith.constant 0 : index
    %c0_11 = arith.constant 0 : index
    %10 = vector.load %arg5[%c0_10, %c0_11] : memref<64x18xbf16, #tpu.memory_space<vmem>>, vector<64x18xbf16>
    tpu.vector_store %arg5[%c0_10, %c0_11], %9 {strides = array<i32>} : memref<64x18xbf16, #tpu.memory_space<vmem>>, vector<64x18xbf16>,
    return
  }
  func.func @transform_0(%arg0: i32) -> (i32, i32) {
    %c0_i32 = arith.constant 0 : i32
    %c0_i32_0 = arith.constant 0 : i32
    return %arg0, %c0_i32 : i32, i32
  }
  func.func @transform_1(%arg0: i32) -> (i32, i32) {
    %c0_i32 = arith.constant 0 : i32
    %c0_i32_0 = arith.constant 0 : i32
    %c0_i32_1 = arith.constant 0 : i32
    return %c0_i32, %c0_i32_0 : i32, i32
  }
  func.func @transform_2(%arg0: i32) -> (i32, i32) {
    %c0_i32 = arith.constant 0 : i32
    %c0_i32_0 = arith.constant 0 : i32
    %c0_i32_1 = arith.constant 0 : i32
    return %c0_i32, %c0_i32_0 : i32, i32
  }
  func.func @transform_3(%arg0: i32) -> (i32, i32) {
    %c0_i32 = arith.constant 0 : i32
    %c0_i32_0 = arith.constant 0 : i32
    %c0_i32_1 = arith.constant 0 : i32
    return %c0_i32, %c0_i32_0 : i32, i32
  }
  func.func @transform_4(%arg0: i32) -> (i32, i32) {
    %c0_i32 = arith.constant 0 : i32
    %c0_i32_0 = arith.constant 0 : i32
    return %arg0, %c0_i32 : i32, i32
  }
  func.func @transform_5(%arg0: i32) -> (i32, i32) {
    %c0_i32 = arith.constant 0 : i32
    %c0_i32_0 = arith.constant 0 : i32
    return %arg0, %c0_i32 : i32, i32
  }
}

</mosaic_0001>

<llo_original>
// kernel: tpu_custom_call.1
$region0: #{tpu_custom_call.1}
  #allocation0 [shape = 'u32[]', space=smem, size = 0x4, offset = 0x4, fixed_abs, tag = 'smem constant byte address 0x4 - core index']
  #allocation1 [shape = 'u32[144,128]{1,0:T(1,128)}', space=vmem, size = 0x12000, scoped, tag = 'internal scratch']
  %s0 = inlined_call_operand.vmem [shape: f32[128,16], index: 0, kind: input, shape index: {}]
  %s1 = inlined_call_operand.vmem [shape: f32[16,18], index: 1, kind: input, shape index: {}]
  %s2 = inlined_call_operand.vmem [shape: f32[1,18], index: 2, kind: input, shape index: {}]
  %s3 = inlined_call_operand.vmem [shape: f32[18,2], index: 3, kind: input, shape index: {}]
  %s4 = inlined_call_operand.vmem [shape: bf16[128,18], index: 4, kind: output, shape index: {0}]
  %s5 = inlined_call_operand.vmem [shape: f32[128,2], index: 5, kind: output, shape index: {1}]
  %6 = xla_tuple %s4, %s5
  %s7 = sld [smem:[#allocation0]]
  $region57: #{tpu_custom_call.1} parent=0
    _
  %s9 = ssub.s32 1, %s7
  %s10 = scalar_select 0, %s9, %s7
  loop: start=0, step=1, limit=4
  $region2: #{tpu_custom_call.1} parent=0 // loop_pre_header
    _
  $region3: #{tpu_custom_call.1} parent=0 // loop_header
    %s12 = sphi 0, %s16
    %p13 = scmp.ge.s32.totalorder %s12, 4
    %s22 = sphi 0, %s24
    %s25 = sphi 0, %s22
    %s26 = sphi 0, %s25
    %s42 = sphi 0, %s26
    %s46 = sphi 0, %s46
    %s48 = sphi 0, %s46
    %s49 = sphi 0, %s48
    %s63 = sphi 0, %s49
    %s67 = sphi 0, %s67
    %s69 = sphi 0, %s67
    %s70 = sphi 0, %s69
    %s84 = sphi 0, %s70
    %s88 = sphi 0, %s88
    %s90 = sphi 0, %s88
    %s91 = sphi 0, %s90
    %s105 = sphi 0, %s91
    %s111 = sphi 0, %s113
    %s114 = sphi 0, %s111
    %s115 = sphi 0, %s114
    %s131 = sphi 0, %s115
    %s137 = sphi 0, %s139
    %s140 = sphi 0, %s137
    %s141 = sphi 0, %s140
    %s157 = sphi 0, %s141
  $region4: #{tpu_custom_call.1} parent=0 // loop_header_branch
    %15 = sbr.rel (%p13) target = $region8
  $region5: #{tpu_custom_call.1} parent=0 // loop_body
    %s17 = ssub.s32 %s12, 1
    %s18 = ssub.s32 %s12, 2
    %s19 = sadd.s32 %s12, 1
    %s20 = ssub.s32 %s12, %s19
    %p21 = scmp.eq.s32.totalorder %s20, 0
    %s23 = sadd.s32 %s22, 1
    %s24 = scalar_select %p21, %s22, %s23
    %p27 = pneg %p21
    %p28 = scmp.eq.s32.totalorder %s12, 1
    %p29 = por %p27, %p28
    %p30 = scmp.ne.s32.totalorder %s22, %s25
    %p31 = scmp.eq.s32.totalorder %s12, 0
    %p32 = por %p30, %p31
    %p33 = scmp.ne.s32.totalorder %s22, %s25
    %p34 = scmp.eq.s32.totalorder %s17, 1
    %p35 = por %p33, %p34
    %p36 = scmp.ne.s32.totalorder %s25, %s26
    %p37 = scmp.eq.s32.totalorder %s17, 0
    %p38 = por %p36, %p37
    %p39 = scmp.ne.s32.totalorder %s25, %s26
    %p40 = scmp.eq.s32.totalorder %s18, 1
    %p41 = por %p39, %p40
    %p43 = scmp.ne.s32.totalorder %s26, %s42
    %p44 = scmp.eq.s32.totalorder %s18, 0
    %p45 = por %p43, %p44
    %s47 = sadd.s32 %s46, 1
    %p50 = scmp.eq.s32.totalorder %s12, 1
    %p51 = scmp.ne.s32.totalorder %s46, %s48
    %p52 = scmp.eq.s32.totalorder %s12, 0
    %p53 = por %p51, %p52
    %p54 = scmp.ne.s32.totalorder %s46, %s48
    %p55 = scmp.eq.s32.totalorder %s17, 1
    %p56 = por %p54, %p55
    %p57 = scmp.ne.s32.totalorder %s48, %s49
    %p58 = scmp.eq.s32.totalorder %s17, 0
    %p59 = por %p57, %p58
    %p60 = scmp.ne.s32.totalorder %s48, %s49
    %p61 = scmp.eq.s32.totalorder %s18, 1
    %p62 = por %p60, %p61
    %p64 = scmp.ne.s32.totalorder %s49, %s63
    %p65 = scmp.eq.s32.totalorder %s18, 0
    %p66 = por %p64, %p65
    %s68 = sadd.s32 %s67, 1
    %p71 = scmp.eq.s32.totalorder %s12, 1
    %p72 = scmp.ne.s32.totalorder %s67, %s69
    %p73 = scmp.eq.s32.totalorder %s12, 0
    %p74 = por %p72, %p73
    %p75 = scmp.ne.s32.totalorder %s67, %s69
    %p76 = scmp.eq.s32.totalorder %s17, 1
    %p77 = por %p75, %p76
    %p78 = scmp.ne.s32.totalorder %s69, %s70
    %p79 = scmp.eq.s32.totalorder %s17, 0
    %p80 = por %p78, %p79
    %p81 = scmp.ne.s32.totalorder %s69, %s70
    %p82 = scmp.eq.s32.totalorder %s18, 1
    %p83 = por %p81, %p82
    %p85 = scmp.ne.s32.totalorder %s70, %s84
    %p86 = scmp.eq.s32.totalorder %s18, 0
    %p87 = por %p85, %p86
    %s89 = sadd.s32 %s88, 1
    %p92 = scmp.eq.s32.totalorder %s12, 1
    %p93 = scmp.ne.s32.totalorder %s88, %s90
    %p94 = scmp.eq.s32.totalorder %s12, 0
    %p95 = por %p93, %p94
    %p96 = scmp.ne.s32.totalorder %s88, %s90
    %p97 = scmp.eq.s32.totalorder %s17, 1
    %p98 = por %p96, %p97
    %p99 = scmp.ne.s32.totalorder %s90, %s91
    %p100 = scmp.eq.s32.totalorder %s17, 0
    %p101 = por %p99, %p100
    %p102 = scmp.ne.s32.totalorder %s90, %s91
    %p103 = scmp.eq.s32.totalorder %s18, 1
    %p104 = por %p102, %p103
    %p106 = scmp.ne.s32.totalorder %s91, %s105
    %p107 = scmp.eq.s32.totalorder %s18, 0
    %p108 = por %p106, %p107
    %s109 = ssub.s32 %s12, %s19
    %p110 = scmp.eq.s32.totalorder %s109, 0
    %s112 = sadd.s32 %s111, 1
    %s113 = scalar_select %p110, %s111, %s112
    %p116 = pneg %p110
    %p117 = scmp.eq.s32.totalorder %s12, 1
    %p118 = por %p116, %p117
    %p119 = scmp.ne.s32.totalorder %s111, %s114
    %p120 = scmp.eq.s32.totalorder %s12, 0
    %p121 = por %p119, %p120
    %p122 = scmp.ne.s32.totalorder %s111, %s114
    %p123 = scmp.eq.s32.totalorder %s17, 1
    %p124 = por %p122, %p123
    %p125 = scmp.ne.s32.totalorder %s114, %s115
    %p126 = scmp.eq.s32.totalorder %s17, 0
    %p127 = por %p125, %p126
    %p128 = scmp.ne.s32.totalorder %s114, %s115
    %p129 = scmp.eq.s32.totalorder %s18, 1
    %p130 = por %p128, %p129
    %p132 = scmp.ne.s32.totalorder %s115, %s131
    %p133 = scmp.eq.s32.totalorder %s18, 0
    %p134 = por %p132, %p133
    %s135 = ssub.s32 %s12, %s19
    %p136 = scmp.eq.s32.totalorder %s135, 0
    %s138 = sadd.s32 %s137, 1
    %s139 = scalar_select %p136, %s137, %s138
    %p142 = pneg %p136
    %p143 = scmp.eq.s32.totalorder %s12, 1
    %p144 = por %p142, %p143
    %p145 = scmp.ne.s32.totalorder %s137, %s140
    %p146 = scmp.eq.s32.totalorder %s12, 0
    %p147 = por %p145, %p146
    %p148 = scmp.ne.s32.totalorder %s137, %s140
    %p149 = scmp.eq.s32.totalorder %s17, 1
    %p150 = por %p148, %p149
    %p151 = scmp.ne.s32.totalorder %s140, %s141
    %p152 = scmp.eq.s32.totalorder %s17, 0
    %p153 = por %p151, %p152
    %p154 = scmp.ne.s32.totalorder %s140, %s141
    %p155 = scmp.eq.s32.totalorder %s18, 1
    %p156 = por %p154, %p155
    %p158 = scmp.ne.s32.totalorder %s141, %s157
    %p159 = scmp.eq.s32.totalorder %s18, 0
    %p160 = por %p158, %p159
    %p161 = scmp.le.s32.totalorder 1, %s12
    %p162 = scmp.lt.s32.totalorder %s12, 3
    %p163 = pnand %p161, %p162
    %p164 = pneg %p163
    // Predicated region
    $region9: #{tpu_custom_call.1} parent=5 // pred_check
      _
    $region10: #{tpu_custom_call.1} parent=5 // pred_check_branch
      %166 = sbr.rel (%p163) target = $region12
    $region11: #{tpu_custom_call.1} parent=5 // pred_region
      %s167 = ssub.s32 %s12, 1
      // Predicated region
      $region13: #{tpu_custom_call.1} parent=11 // pred_check
        %p168 = pneg %p59
      $region14: #{tpu_custom_call.1} parent=11 // pred_check_branch
        %170 = sbr.rel (%p168) target = $region16
      $region15: #{tpu_custom_call.1} parent=11 // pred_region
        _
      $region16: #{tpu_custom_call.1} parent=11 // pred_fallthru
        _
      // Predicated region
      $region17: #{tpu_custom_call.1} parent=11 // pred_check
        %p171 = pneg %p80
      $region18: #{tpu_custom_call.1} parent=11 // pred_check_branch
        %173 = sbr.rel (%p171) target = $region20
      $region19: #{tpu_custom_call.1} parent=11 // pred_region
        _
      $region20: #{tpu_custom_call.1} parent=11 // pred_fallthru
        _
      // Predicated region
      $region21: #{tpu_custom_call.1} parent=11 // pred_check
        %p174 = pneg %p101
      $region22: #{tpu_custom_call.1} parent=11 // pred_check_branch
        %176 = sbr.rel (%p174) target = $region24
      $region23: #{tpu_custom_call.1} parent=11 // pred_region
        _
      $region24: #{tpu_custom_call.1} parent=11 // pred_fallthru
        _
    $region12: #{tpu_custom_call.1} parent=5 // pred_fallthru
      _
    %p177 = scmp.lt.s32.totalorder %s12, 2
    // Predicated region
    $region25: #{tpu_custom_call.1} parent=5 // pred_check
      %p178 = pneg %p177
    $region26: #{tpu_custom_call.1} parent=5 // pred_check_branch
      %180 = sbr.rel (%p178) target = $region28
    $region27: #{tpu_custom_call.1} parent=5 // pred_region
      // Predicated region
      $region29: #{tpu_custom_call.1} parent=27 // pred_check
        %p181 = pneg %p32
      $region30: #{tpu_custom_call.1} parent=27 // pred_check_branch
        %183 = sbr.rel (%p181) target = $region32
      $region31: #{tpu_custom_call.1} parent=27 // pred_region
        %s184 = smul.u32 8, %s12
        %p185 = scmp.lt.s32.totalorder %s184, 15
        %s186 = scalar_select %p185, %s184, 15
        %s187 = smul.addr %s186, 8
        %s188 = scalar_lea.vmem %s0, %s187
        %s189 = smul.u32 8, %s12
      $region32: #{tpu_custom_call.1} parent=27 // pred_fallthru
        _
    $region28: #{tpu_custom_call.1} parent=5 // pred_fallthru
      _
    %p190 = scmp.le.s32.totalorder 1, %s12
    %p191 = scmp.lt.s32.totalorder %s12, 3
    %p192 = pnand %p190, %p191
    %p193 = pneg %p192
    // Predicated region
    $region33: #{tpu_custom_call.1} parent=5 // pred_check
      _
    $region34: #{tpu_custom_call.1} parent=5 // pred_check_branch
      %195 = sbr.rel (%p192) target = $region36
    $region35: #{tpu_custom_call.1} parent=5 // pred_region
      %s196 = ssub.s32 %s12, 1
      %s197 = smul.u32 8, %s17
      %p198 = scmp.lt.s32.totalorder %s197, 15
      %s199 = scalar_select %p198, %s197, 15
      %s200 = smul.addr %s199, 8
      %s201 = scalar_lea.vmem %s0, %s200
      %p202 = pneg %p38
      %p203 = pneg %p35
      %p204 = pneg %p59
      %p205 = pneg %p56
      %p206 = pneg %p80
      %p207 = pneg %p77
      %p208 = pneg %p101
      %p209 = pneg %p98
      %p210 = pneg %p127
      %p211 = pneg %p124
      %s212 = smul.u32 8, %s17
      %p213 = scmp.lt.s32.totalorder %s212, 15
      %s214 = scalar_select %p213, %s212, 15
      %s215 = smul.addr %s214, 4
      %s216 = scalar_lea.vmem %s4, %s215
      %p217 = pneg %p153
      %p218 = pneg %p150
      %s219 = smul.u32 8, %s17
      %p220 = scmp.lt.s32.totalorder %s219, 15
      %s221 = scalar_select %p220, %s219, 15
      %s222 = smul.addr %s221, 8
      %s223 = scalar_lea.vmem %s5, %s222
      %s224 = smul.u32 8, %s17
      %p225 = scmp.lt.s32.totalorder %s224, 15
      %s226 = scalar_select %p225, %s224, 15
      %s227 = smul.addr %s226, 8
      %s228 = scalar_lea.vmem %s0, %s227
      %s229 = smul.u32 8, %s17
      %s230 = smul.u32 8, %s17
      %p231 = scmp.lt.s32.totalorder %s230, 15
      %s232 = scalar_select %p231, %s230, 15
      %s233 = smul.addr %s232, 4
      %s234 = scalar_lea.vmem %s4, %s233
      %s235 = smul.u32 8, %s17
      %s236 = smul.u32 8, %s17
      %p237 = scmp.lt.s32.totalorder %s236, 15
      %s238 = scalar_select %p237, %s236, 15
      %s239 = smul.addr %s238, 8
      %s240 = scalar_lea.vmem %s5, %s239
      %s241 = smul.u32 8, %s17
      %v242 = vld [vmem:[%s228] sm:$0xff]
      %v243 = vld [vmem:[%s228 + $0x8] sm:$0xff]
      %v244 = vld [vmem:[%s228 + $0x10] sm:$0xff]
      %v245 = vld [vmem:[%s228 + $0x18] sm:$0xff]
      %v246 = vld [vmem:[%s228 + $0x20] sm:$0xff]
      %v247 = vld [vmem:[%s228 + $0x28] sm:$0xff]
      %v248 = vld [vmem:[%s228 + $0x30] sm:$0xff]
      %v249 = vld [vmem:[%s228 + $0x38] sm:$0xff]
      %v250 = vld [vmem:[%s1] sm:$0xff]
      %v251 = vld [vmem:[%s1 + $0x8] sm:$0xff]
      %v252 = vld [vmem:[%s2] sm:$0x1]
      %v254 = vlaneseq
      %v255 = vshrl.u32 %v254, 7
      %v256 = vsub.s32 0, %v255
      %v257 = vrot.slane %v252, %v256
      %vm259 = vcmask 130048
      %v261 = vsel %vm259, %v242, 0
      %v264 = vsel %vm259, %v243, 0
      %v267 = vsel %vm259, %v244, 0
      %v270 = vsel %vm259, %v245, 0
      %v273 = vsel %vm259, %v246, 0
      %v276 = vsel %vm259, %v247, 0
      %v279 = vsel %vm259, %v248, 0
      %v282 = vsel %vm259, %v249, 0
      %284 = vmatprep.subr.mxu0 0.0
      %285 = vmatpush1.msra.mxu0 %v250
      %286 = vmatprep.subr.mxu0 0.0
      %287 = vmatpush1.msra.mxu0 %v251
      %288 = vmatprep.subr.mxu0 0.0
      %289 = vmatpush1.msra.mxu0 0.0
      %290 = vmatprep.subr.mxu0 0.0
      %291 = vmatpush1.msra.mxu0 0.0
      %292 = vmatprep.subr.mxu0 0.0
      %293 = vmatpush1.msra.mxu0 0.0
      %294 = vmatprep.subr.mxu0 0.0
      %295 = vmatpush1.msra.mxu0 0.0
      %296 = vmatprep.subr.mxu0 0.0
      %297 = vmatpush1.msra.mxu0 0.0
      %298 = vmatprep.subr.mxu0 0.0
      %299 = vmatpush1.msra.mxu0 0.0
      %300 = vmatprep.subr.mxu0 0.0
      %301 = vmatpush1.msra.mxu0 0.0
      %302 = vmatprep.subr.mxu0 0.0
      %303 = vmatpush1.msra.mxu0 0.0
      %304 = vmatprep.subr.mxu0 0.0
      %305 = vmatpush1.msra.mxu0 0.0
      %306 = vmatprep.subr.mxu0 0.0
      %307 = vmatpush1.msra.mxu0 0.0
      %308 = vmatprep.subr.mxu0 0.0
      %309 = vmatpush1.msra.mxu0 0.0
      %310 = vmatprep.subr.mxu0 0.0
      %311 = vmatpush1.msra.mxu0 0.0
      %312 = vmatprep.subr.mxu0 0.0
      %313 = vmatpush1.msra.mxu0 0.0
      %314 = vmatprep.subr.mxu0 0.0
      %315 = vmatpush1.msra.mxu0 0.0
      %316 = vmatprep.subr.mxu0 0.0
      %317 = vmatpush1.msra.mxu0 0.0
      %318 = vmatprep.subr.mxu0 0.0
      %319 = vmatpush1.msra.mxu0 0.0
      %320 = vmatprep.subr.mxu0 0.0
      %321 = vmatpush1.msra.mxu0 0.0
      %322 = vmatprep.subr.mxu0 0.0
      %323 = vmatpush1.msra.mxu0 0.0
      %324 = vmatprep.subr.mxu0 0.0
      %325 = vmatpush1.msra.mxu0 0.0
      %326 = vmatprep.subr.mxu0 0.0
      %327 = vmatpush1.msra.mxu0 0.0
      %328 = vmatprep.subr.mxu0 0.0
      %329 = vmatpush1.msra.mxu0 0.0
      %330 = vmatprep.subr.mxu0 0.0
      %331 = vmatpush1.msra.mxu0 0.0
      %332 = vmatprep.subr.mxu0 0.0
      %333 = vmatpush1.msra.mxu0 0.0
      %334 = vmatprep.subr.mxu0 0.0
      %335 = vmatpush1.msra.mxu0 0.0
      %336 = vmatprep.subr.mxu0 0.0
      %337 = vmatpush1.msra.mxu0 0.0
      %338 = vmatprep.subr.mxu0 0.0
      %339 = vmatpush1.msra.mxu0 0.0
      %340 = vmatprep.subr.mxu0 0.0
      %341 = vmatpush1.msra.mxu0 0.0
      %342 = vmatprep.subr.mxu0 0.0
      %343 = vmatpush1.msra.mxu0 0.0
      %344 = vmatprep.subr.mxu0 0.0
      %345 = vmatpush1.msra.mxu0 0.0
      %346 = vmatprep.subr.mxu0 0.0
      %347 = vmatpush1.msra.mxu0 0.0
      %348 = vmatprep.mubr.f32.mxu0 0.0
      %349 = vmatmul.mubr.f32.gmra.mrb[0].mxu0 %v261
      %v350 = vpop.f32.mrb[0].mxu0
      %v351 = vadd.f32 %v257, %v350
      %v352 = vpop.f32.mrb[0].mxu0
      %353 = vmatprep.mubr.f32.mxu0 0.0
      %354 = vmatmul.mubr.f32.gmra.mrb[0].mxu0 %v264
      %v355 = vpop.f32.mrb[0].mxu0
      %v356 = vadd.f32 %v257, %v355
      %v357 = vpop.f32.mrb[0].mxu0
      %358 = vmatprep.mubr.f32.mxu0 0.0
      %359 = vmatmul.mubr.f32.gmra.mrb[0].mxu0 %v267
      %v360 = vpop.f32.mrb[0].mxu0
      %v361 = vadd.f32 %v257, %v360
      %v362 = vpop.f32.mrb[0].mxu0
      %363 = vmatprep.mubr.f32.mxu0 0.0
      %364 = vmatmul.mubr.f32.gmra.mrb[0].mxu0 %v270
      %v365 = vpop.f32.mrb[0].mxu0
      %v366 = vadd.f32 %v257, %v365
      %v367 = vpop.f32.mrb[0].mxu0
      %368 = vmatprep.mubr.f32.mxu0 0.0
      %369 = vmatmul.mubr.f32.gmra.mrb[0].mxu0 %v273
      %v370 = vpop.f32.mrb[0].mxu0
      %v371 = vadd.f32 %v257, %v370
      %v372 = vpop.f32.mrb[0].mxu0
      %373 = vmatprep.mubr.f32.mxu0 0.0
      %374 = vmatmul.mubr.f32.gmra.mrb[0].mxu0 %v276
      %v375 = vpop.f32.mrb[0].mxu0
      %v376 = vadd.f32 %v257, %v375
      %v377 = vpop.f32.mrb[0].mxu0
      %378 = vmatprep.mubr.f32.mxu0 0.0
      %379 = vmatmul.mubr.f32.gmra.mrb[0].mxu0 %v279
      %v380 = vpop.f32.mrb[0].mxu0
      %v381 = vadd.f32 %v257, %v380
      %v382 = vpop.f32.mrb[0].mxu0
      %383 = vmatprep.mubr.f32.mxu0 0.0
      %384 = vmatmul.mubr.f32.gmra.mrb[0].mxu0 %v282
      %v385 = vpop.f32.mrb[0].mxu0
      %v386 = vadd.f32 %v257, %v385
      %v387 = vpop.f32.mrb[0].mxu0
      %388 = vdwg.mxu0
      %v389 = vld [vmem:[%s3] sm:$0xff]
      %v390 = vld [vmem:[%s3 + $0x8] sm:$0xff]
      %v391 = vld [vmem:[%s3 + $0x10] sm:$0x3]
      %vm392 = vcmask 146432
      %v394 = vsel %vm392, %v351, 0
      %v397 = vsel %vm392, %v356, 0
      %v400 = vsel %vm392, %v361, 0
      %v403 = vsel %vm392, %v366, 0
      %v406 = vsel %vm392, %v371, 0
      %v409 = vsel %vm392, %v376, 0
      %v412 = vsel %vm392, %v381, 0
      %v415 = vsel %vm392, %v386, 0
      %vm417 = vcmask 1041408
      %v419 = vsel %vm417, %v391, 0
      %421 = vmatprep.subr.mxu0 0.0
      %422 = vmatpush1.msra.mxu0 %v389
      %423 = vmatprep.subr.mxu0 0.0
      %424 = vmatpush1.msra.mxu0 %v390
      %425 = vmatprep.subr.mxu0 0.0
      %426 = vmatpush1.msra.mxu0 %v419
      %427 = vmatprep.subr.mxu0 0.0
      %428 = vmatpush1.msra.mxu0 0.0
      %429 = vmatprep.subr.mxu0 0.0
      %430 = vmatpush1.msra.mxu0 0.0
      %431 = vmatprep.subr.mxu0 0.0
      %432 = vmatpush1.msra.mxu0 0.0
      %433 = vmatprep.subr.mxu0 0.0
      %434 = vmatpush1.msra.mxu0 0.0
      %435 = vmatprep.subr.mxu0 0.0
      %436 = vmatpush1.msra.mxu0 0.0
      %437 = vmatprep.subr.mxu0 0.0
      %438 = vmatpush1.msra.mxu0 0.0
      %439 = vmatprep.subr.mxu0 0.0
      %440 = vmatpush1.msra.mxu0 0.0
      %441 = vmatprep.subr.mxu0 0.0
      %442 = vmatpush1.msra.mxu0 0.0
      %443 = vmatprep.subr.mxu0 0.0
      %444 = vmatpush1.msra.mxu0 0.0
      %445 = vmatprep.subr.mxu0 0.0
      %446 = vmatpush1.msra.mxu0 0.0
      %447 = vmatprep.subr.mxu0 0.0
      %448 = vmatpush1.msra.mxu0 0.0
      %449 = vmatprep.subr.mxu0 0.0
      %450 = vmatpush1.msra.mxu0 0.0
      %451 = vmatprep.subr.mxu0 0.0
      %452 = vmatpush1.msra.mxu0 0.0
      %453 = vmatprep.subr.mxu0 0.0
      %454 = vmatpush1.msra.mxu0 0.0
      %455 = vmatprep.subr.mxu0 0.0
      %456 = vmatpush1.msra.mxu0 0.0
      %457 = vmatprep.subr.mxu0 0.0
      %458 = vmatpush1.msra.mxu0 0.0
      %459 = vmatprep.subr.mxu0 0.0
      %460 = vmatpush1.msra.mxu0 0.0
      %461 = vmatprep.subr.mxu0 0.0
      %462 = vmatpush1.msra.mxu0 0.0
      %463 = vmatprep.subr.mxu0 0.0
      %464 = vmatpush1.msra.mxu0 0.0
      %465 = vmatprep.subr.mxu0 0.0
      %466 = vmatpush1.msra.mxu0 0.0
      %467 = vmatprep.subr.mxu0 0.0
      %468 = vmatpush1.msra.mxu0 0.0
      %469 = vmatprep.subr.mxu0 0.0
      %470 = vmatpush1.msra.mxu0 0.0
      %471 = vmatprep.subr.mxu0 0.0
      %472 = vmatpush1.msra.mxu0 0.0
      %473 = vmatprep.subr.mxu0 0.0
      %474 = vmatpush1.msra.mxu0 0.0
      %475 = vmatprep.subr.mxu0 0.0
      %476 = vmatpush1.msra.mxu0 0.0
      %477 = vmatprep.subr.mxu0 0.0
      %478 = vmatpush1.msra.mxu0 0.0
      %479 = vmatprep.subr.mxu0 0.0
      %480 = vmatpush1.msra.mxu0 0.0
      %481 = vmatprep.subr.mxu0 0.0
      %482 = vmatpush1.msra.mxu0 0.0
      %483 = vmatprep.subr.mxu0 0.0
      %484 = vmatpush1.msra.mxu0 0.0
      %485 = vmatprep.mubr.f32.mxu0 0.0
      %486 = vmatmul.mubr.f32.gmra.mrb[0].mxu0 %v394
      %v487 = vpop.f32.mrb[0].mxu0
      %v488 = vadd.f32 0.0, %v487
      %v489 = vpop.f32.mrb[0].mxu0
      %490 = vmatprep.mubr.f32.mxu0 0.0
      %491 = vmatmul.mubr.f32.gmra.mrb[0].mxu0 %v397
      %v492 = vpop.f32.mrb[0].mxu0
      %v493 = vadd.f32 0.0, %v492
      %v494 = vpop.f32.mrb[0].mxu0
      %495 = vmatprep.mubr.f32.mxu0 0.0
      %496 = vmatmul.mubr.f32.gmra.mrb[0].mxu0 %v400
      %v497 = vpop.f32.mrb[0].mxu0
      %v498 = vadd.f32 0.0, %v497
      %v499 = vpop.f32.mrb[0].mxu0
      %500 = vmatprep.mubr.f32.mxu0 0.0
      %501 = vmatmul.mubr.f32.gmra.mrb[0].mxu0 %v403
      %v502 = vpop.f32.mrb[0].mxu0
      %v503 = vadd.f32 0.0, %v502
      %v504 = vpop.f32.mrb[0].mxu0
      %505 = vmatprep.mubr.f32.mxu0 0.0
      %506 = vmatmul.mubr.f32.gmra.mrb[0].mxu0 %v406
      %v507 = vpop.f32.mrb[0].mxu0
      %v508 = vadd.f32 0.0, %v507
      %v509 = vpop.f32.mrb[0].mxu0
      %510 = vmatprep.mubr.f32.mxu0 0.0
      %511 = vmatmul.mubr.f32.gmra.mrb[0].mxu0 %v409
      %v512 = vpop.f32.mrb[0].mxu0
      %v513 = vadd.f32 0.0, %v512
      %v514 = vpop.f32.mrb[0].mxu0
      %515 = vmatprep.mubr.f32.mxu0 0.0
      %516 = vmatmul.mubr.f32.gmra.mrb[0].mxu0 %v412
      %v517 = vpop.f32.mrb[0].mxu0
      %v518 = vadd.f32 0.0, %v517
      %v519 = vpop.f32.mrb[0].mxu0
      %520 = vmatprep.mubr.f32.mxu0 0.0
      %521 = vmatmul.mubr.f32.gmra.mrb[0].mxu0 %v415
      %v522 = vpop.f32.mrb[0].mxu0
      %v523 = vadd.f32 0.0, %v522
      %v524 = vpop.f32.mrb[0].mxu0
      %525 = vdwg.mxu0
      %vm526 = vcmask 15360
      %527 = vst.msk [vmem:[%s240] sm:$0xff] %vm526, %v488
      %528 = vst.msk [vmem:[%s240 + $0x8] sm:$0xff] %vm526, %v493
      %529 = vst.msk [vmem:[%s240 + $0x10] sm:$0xff] %vm526, %v498
      %530 = vst.msk [vmem:[%s240 + $0x18] sm:$0xff] %vm526, %v503
      %531 = vst.msk [vmem:[%s240 + $0x20] sm:$0xff] %vm526, %v508
      %532 = vst.msk [vmem:[%s240 + $0x28] sm:$0xff] %vm526, %v513
      %533 = vst.msk [vmem:[%s240 + $0x30] sm:$0xff] %vm526, %v518
      %534 = vst.msk [vmem:[%s240 + $0x38] sm:$0xff] %vm526, %v523
      %v535 = vpack.c.bf16 %v356, %v351
      %v536 = vpack.c.bf16 %v366, %v361
      %v537 = vpack.c.bf16 %v376, %v371
      %v538 = vpack.c.bf16 %v386, %v381
      %v543 = vunpack.c.l.b16 %v535
      %v544 = vunpack.c.h.b16 %v535
      %v545 = vunpack.c.l.b16 %v536
      %v546 = vunpack.c.h.b16 %v536
      %v547 = vunpack.c.l.b16 %v537
      %v548 = vunpack.c.h.b16 %v537
      %v549 = vunpack.c.l.b16 %v538
      %v550 = vunpack.c.h.b16 %v538
      %v551 = vpack.c.b16 %v543, %v543
      %v552 = vpack.c.b16 %v544, %v544
      %v553 = vpack.c.b16 %v545, %v545
      %v554 = vpack.c.b16 %v546, %v546
      %v555 = vpack.c.b16 %v547, %v547
      %v556 = vpack.c.b16 %v548, %v548
      %v557 = vpack.c.b16 %v549, %v549
      %v558 = vpack.c.b16 %v550, %v550
      %vm567 = vcmask 142336
      %568 = vst.msk [vmem:[%s234] sm:$0xf] %vm567, %v551
      %569 = vst.msk [vmem:[%s234 + $0x4] sm:$0xf] %vm567, %v552
      %570 = vst.msk [vmem:[%s234 + $0x8] sm:$0xf] %vm567, %v553
      %571 = vst.msk [vmem:[%s234 + $0xc] sm:$0xf] %vm567, %v554
      %572 = vst.msk [vmem:[%s234 + $0x10] sm:$0xf] %vm567, %v555
      %573 = vst.msk [vmem:[%s234 + $0x14] sm:$0xf] %vm567, %v556
      %574 = vst.msk [vmem:[%s234 + $0x18] sm:$0xf] %vm567, %v557
      %575 = vst.msk [vmem:[%s234 + $0x1c] sm:$0xf] %vm567, %v558
      %s576 = smul.u32 8, %s17
      %p577 = scmp.lt.s32.totalorder %s576, 15
      %s578 = scalar_select %p577, %s576, 15
      %s579 = smul.addr %s578, 4
      %s580 = scalar_lea.vmem %s4, %s579
      %s581 = smul.u32 8, %s17
      %p582 = scmp.lt.s32.totalorder %s581, 15
      %s583 = scalar_select %p582, %s581, 15
      %s584 = smul.addr %s583, 8
      %s585 = scalar_lea.vmem %s5, %s584
      // Predicated region
      $region37: #{tpu_custom_call.1} parent=35 // pred_check
        %p586 = pneg %p124
      $region38: #{tpu_custom_call.1} parent=35 // pred_check_branch
        %588 = sbr.rel (%p586) target = $region40
      $region39: #{tpu_custom_call.1} parent=35 // pred_region
        %s589 = smul.u32 8, %s17
      $region40: #{tpu_custom_call.1} parent=35 // pred_fallthru
        _
      // Predicated region
      $region41: #{tpu_custom_call.1} parent=35 // pred_check
        %p590 = pneg %p150
      $region42: #{tpu_custom_call.1} parent=35 // pred_check_branch
        %592 = sbr.rel (%p590) target = $region44
      $region43: #{tpu_custom_call.1} parent=35 // pred_region
        %s593 = smul.u32 8, %s17
      $region44: #{tpu_custom_call.1} parent=35 // pred_fallthru
        _
    $region36: #{tpu_custom_call.1} parent=5 // pred_fallthru
      _
    %p594 = scmp.le.s32.totalorder 2, %s12
    // Predicated region
    $region45: #{tpu_custom_call.1} parent=5 // pred_check
      %p595 = pneg %p594
    $region46: #{tpu_custom_call.1} parent=5 // pred_check_branch
      %597 = sbr.rel (%p595) target = $region48
    $region47: #{tpu_custom_call.1} parent=5 // pred_region
      %s598 = ssub.s32 %s12, 2
      // Predicated region
      $region49: #{tpu_custom_call.1} parent=47 // pred_check
        %p599 = pneg %p130
      $region50: #{tpu_custom_call.1} parent=47 // pred_check_branch
        %601 = sbr.rel (%p599) target = $region52
      $region51: #{tpu_custom_call.1} parent=47 // pred_region
        %s602 = smul.u32 8, %s18
        %p603 = scmp.lt.s32.totalorder %s602, 15
        %s604 = scalar_select %p603, %s602, 15
        %s605 = smul.addr %s604, 4
        %s606 = scalar_lea.vmem %s4, %s605
      $region52: #{tpu_custom_call.1} parent=47 // pred_fallthru
        _
      // Predicated region
      $region53: #{tpu_custom_call.1} parent=47 // pred_check
        %p607 = pneg %p156
      $region54: #{tpu_custom_call.1} parent=47 // pred_check_branch
        %609 = sbr.rel (%p607) target = $region56
      $region55: #{tpu_custom_call.1} parent=47 // pred_region
        %s610 = smul.u32 8, %s18
        %p611 = scmp.lt.s32.totalorder %s610, 15
        %s612 = scalar_select %p611, %s610, 15
        %s613 = smul.addr %s612, 8
        %s614 = scalar_lea.vmem %s5, %s613
      $region56: #{tpu_custom_call.1} parent=47 // pred_fallthru
        _
    $region48: #{tpu_custom_call.1} parent=5 // pred_fallthru
      _
  $region6: #{tpu_custom_call.1} parent=0 // loop_footer
    %s16 = sadd.s32 1, %s12
  $region7: #{tpu_custom_call.1} parent=0 // loop_footer_branch
    %11 = sbr.rel target = $region3
  $region8: #{tpu_custom_call.1} parent=0 // loop_exit
    _

</llo_original>
